<compile_context>
chip_gen: v7x
topology: tpu7x:2x2x1
jax: 0.10.0
libtpu: 0.0.40
codegen_flags: <defaults>
</compile_context>

<pallas_src>
import functools
import math

import jax
import jax.numpy as jnp
from jax import lax
from jax.experimental import pallas as pl
from jax.experimental.pallas import tpu as pltpu

_LANE = 128


def _round_up(x, m):
    return (x + m - 1) // m * m


def _vmem_capacity_bytes():
    try:
        return int(pltpu.get_tpu_info().vmem_capacity_bytes)
    except Exception:
        return 64 << 20  # conservative fallback (v7x per-TensorCore)


def _gelu_exact(x):
    # nn.GELU() default: exact erf-based GELU.
    return 0.5 * x * (1.0 + lax.erf(x * (1.0 / math.sqrt(2.0))))


def _mlp_kernel(x_ref, w1_ref, b1_ref, w2_ref, b2_ref, o_ref, *, act_approx):
    # Cast activations to the stored weight dtype (bf16 on the MXU if the
    # params were prepared in bf16); accumulate in f32.
    x = x_ref[...].astype(w1_ref.dtype)                                # (tm, C)
    h = jnp.dot(x, w1_ref[...], preferred_element_type=jnp.float32)    # (tm, Hp)
    h = h + b1_ref[...].astype(jnp.float32)
    if act_approx:
        h = jax.nn.gelu(h, approximate=True)        # exp/tanh -> EUP slot
    else:
        h = _gelu_exact(h)                          # matches nn.GELU()
    # dropout p=0.0 is the identity.
    y = jnp.dot(h.astype(w2_ref.dtype), w2_ref[...],
                preferred_element_type=jnp.float32)                    # (tm, Co)
    y = y + b2_ref[...].astype(jnp.float32)
    o_ref[...] = y.astype(o_ref.dtype)


def prepare_mlp_params(w1, b1, w2, b2, *, param_dtype=None):
    """Pad the hidden dim to a 128-multiple (zero padding is exact) and
    optionally cast to a narrower MXU dtype (e.g. jnp.bfloat16).
    Call ONCE at parameter setup -- hoisted out of the per-step forward path.

    w1: (C, H); b1: (H,); w2: (H, C_out); b2: (C_out,)
    (weights stored pre-transposed vs. PyTorch nn.Linear; kernel does x @ w)."""
    C, H = w1.shape
    H2, C_out = w2.shape
    assert H2 == H and b1.shape == (H,) and b2.shape == (C_out,)
    H_p = _round_up(H, _LANE)
    pdt = param_dtype if param_dtype is not None else w1.dtype
    w1p = jnp.zeros((C, H_p), pdt).at[:, :H].set(w1.astype(pdt))
    b1p = jnp.zeros((1, H_p), pdt).at[0, :H].set(b1.astype(pdt))
    w2p = jnp.zeros((H_p, C_out), pdt).at[:H, :].set(w2.astype(pdt))
    b2p = jnp.zeros((1, C_out), pdt).at[0, :].set(b2.astype(pdt))
    return w1p, b1p, w2p, b2p


def mlp_forward(x, params, *, tm_max=512, act_approx=False):
    """x: (..., C); params from prepare_mlp_params. Returns (..., C_out)."""
    w1p, b1p, w2p, b2p = params
    *lead, C = x.shape
    M = math.prod(lead) if lead else 1
    assert w1p.shape[0] == C
    H_p = w1p.shape[1]
    C_out = w2p.shape[1]
    dt = x.dtype
    itemsize = jnp.dtype(dt).itemsize
    p_itemsize = jnp.dtype(w1p.dtype).itemsize

    x2 = x.reshape(M, C)  # contiguous reshape: no copy

    # --- per-generation VMEM budgeting --------------------------------------
    w_bytes = (w1p.size + b1p.size + w2p.size + b2p.size) * p_itemsize
    vmem_cap = _vmem_capacity_bytes()
    budget = int(0.6 * vmem_cap)

    def footprint(tm):
        io = 2 * tm * (C + C_out) * itemsize          # double-buffered x / y tiles
        hid = tm * H_p * (4 + p_itemsize)             # f32 hidden + MXU-dtype copy
        return w_bytes + io + hid

    if M <= tm_max:
        tm = M                                        # single block over tokens
    else:
        tm = _round_up(tm_max, _LANE)
        while tm > _LANE and footprint(tm) > budget:
            tm -= _LANE
    grid_m = pl.cdiv(M, tm)

    vmem_limit = int(min(max(footprint(tm) + (4 << 20), 32 << 20),
                         0.75 * vmem_cap))

    cost = pl.CostEstimate(
        flops=2 * M * (C * H_p + H_p * C_out),
        transcendentals=(M * H_p) if act_approx else 0,  # erf lowers to VPU poly
        bytes_accessed=M * (C + C_out) * itemsize + w_bytes,
    )

    # Grid-invariant operands (constant index_map) -> single-buffered.
    resident = dict(pipeline_mode=pl.Buffered(1))
    kernel = functools.partial(_mlp_kernel, act_approx=act_approx)

    out = pl.pallas_call(
        kernel,
        out_shape=jax.ShapeDtypeStruct((M, C_out), dt),
        grid=(grid_m,),
        in_specs=[
            pl.BlockSpec((tm, C), lambda i: (i, 0)),
            pl.BlockSpec((C, H_p), lambda i: (0, 0), **resident),
            pl.BlockSpec((1, H_p), lambda i: (0, 0), **resident),
            pl.BlockSpec((H_p, C_out), lambda i: (0, 0), **resident),
            pl.BlockSpec((1, C_out), lambda i: (0, 0), **resident),
        ],
        out_specs=pl.BlockSpec((tm, C_out), lambda i: (i, 0)),
        compiler_params=pltpu.CompilerParams(
            dimension_semantics=("parallel",),
            vmem_limit_bytes=vmem_limit,
        ),
        cost_estimate=cost,
    )(x2, w1p, b1p, w2p, b2p)

    return out.reshape(*lead, C_out)


def mlp_reference(x, w1, b1, w2, b2):
    h = jnp.einsum("bnc,ch->bnh", x, w1) + b1
    h = 0.5 * h * (1.0 + lax.erf(h / math.sqrt(2.0)))
    return jnp.einsum("bnh,hc->bnc", h, w2) + b2


if __name__ == "__main__":
    # Small shapes consistent with Mlp: in_features=32, hidden_features=64.
    B, N, C, H = 2, 8, 32, 64

    key = jax.random.PRNGKey(0)
    kx, k1, k2, k3, k4 = jax.random.split(key, 5)

    x = jax.random.normal(kx, (B, N, C), dtype=jnp.float32)
    # Deterministic parameters (shapes match nn.Linear, stored transposed).
    w1 = jax.random.normal(k1, (C, H), dtype=jnp.float32) * 0.02
    b1 = jax.random.normal(k2, (H,), dtype=jnp.float32) * 0.02
    w2 = jax.random.normal(k3, (H, C), dtype=jnp.float32) * 0.02
    b2 = jax.random.normal(k4, (C,), dtype=jnp.float32) * 0.02

    y_ref = mlp_reference(x, w1, b1, w2, b2)

    # f32 path: exact GELU, bit-accurate to the reference.
    params_f32 = prepare_mlp_params(w1, b1, w2, b2)          # once, outside hot path
    fwd = jax.jit(mlp_forward)
    y = jax.block_until_ready(fwd(x, params_f32))
    assert y.shape == (B, N, C)
    assert jnp.allclose(y, y_ref, atol=1e-5, rtol=1e-5), "f32 mismatch vs reference"

    # bf16-on-MXU path (per perf review for v6e/v7x): looser tolerance expected.
    params_bf16 = prepare_mlp_params(w1, b1, w2, b2, param_dtype=jnp.bfloat16)
    y_bf16 = jax.block_until_ready(mlp_forward(x, params_bf16))
    assert jnp.allclose(y_bf16, y_ref, atol=5e-2, rtol=5e-2), "bf16 mismatch vs reference"

    print("KERNEL_OK")
</pallas_src>

<mosaic_0001>
module attributes {stable_mosaic.version = 11 : i64} {
  func.func @_mlp_kernel(%arg0: i32, %arg1: memref<16x32xf32, #tpu.memory_space<vmem>>, %arg2: memref<32x128xf32, #tpu.memory_space<vmem>>, %arg3: memref<1x128xf32, #tpu.memory_space<vmem>>, %arg4: memref<128x32xf32, #tpu.memory_space<vmem>>, %arg5: memref<1x32xf32, #tpu.memory_space<vmem>>, %arg6: memref<16x32xf32, #tpu.memory_space<vmem>>) attributes {dimension_semantics = [#tpu.dimension_semantics<parallel>], iteration_bounds = array<i64: 1>, scalar_prefetch = 0 : i64, scratch_operands = 0 : i64, tpu.core_type = #tpu.core_type<tc>, window_params = [{transform_indices = @transform_0, window_bounds = array<i64: 16, 32>}, {pipeline_mode = #tpu.pipeline_mode<synchronous>, transform_indices = @transform_1, window_bounds = array<i64: 32, 128>}, {pipeline_mode = #tpu.pipeline_mode<synchronous>, transform_indices = @transform_2, window_bounds = array<i64: 1, 128>}, {pipeline_mode = #tpu.pipeline_mode<synchronous>, transform_indices = @transform_3, window_bounds = array<i64: 128, 32>}, {pipeline_mode = #tpu.pipeline_mode<synchronous>, transform_indices = @transform_4, window_bounds = array<i64: 1, 32>}, {transform_indices = @transform_5, window_bounds = array<i64: 16, 32>}]} {
    %c0 = arith.constant 0 : index
    %c0_0 = arith.constant 0 : index
    %0 = vector.load %arg1[%c0, %c0_0] : memref<16x32xf32, #tpu.memory_space<vmem>>, vector<16x32xf32>
    %c0_1 = arith.constant 0 : index
    %c0_2 = arith.constant 0 : index
    %1 = vector.load %arg2[%c0_1, %c0_2] : memref<32x128xf32, #tpu.memory_space<vmem>>, vector<32x128xf32>
    %cst = arith.constant dense<0.000000e+00> : vector<16x128xf32>
    %2 = tpu.matmul %0, %1, %cst {dimension_numbers = #tpu.dot_dimension_numbers<[1], [0], [0], [1], [0, 0, 1, 1], [], []>} : vector<16x32xf32>, vector<32x128xf32>, vector<16x128xf32> -> vector<16x128xf32>
    %c0_3 = arith.constant 0 : index
    %c0_4 = arith.constant 0 : index
    %3 = vector.load %arg3[%c0_3, %c0_4] : memref<1x128xf32, #tpu.memory_space<vmem>>, vector<1x128xf32>
    %4 = vector.broadcast %3 : vector<1x128xf32> to vector<16x128xf32>
    %5 = arith.addf %2, %4 : vector<16x128xf32>
    %cst_5 = arith.constant 5.000000e-01 : f32
    %6 = vector.broadcast %cst_5 : f32 to vector<16x128xf32>
    %7 = arith.mulf %6, %5 : vector<16x128xf32>
    %cst_6 = arith.constant 0.707106769 : f32
    %8 = vector.broadcast %cst_6 : f32 to vector<16x128xf32>
    %9 = arith.mulf %5, %8 : vector<16x128xf32>
    %10 = math.erf %9 : vector<16x128xf32>
    %cst_7 = arith.constant 1.000000e+00 : f32
    %11 = vector.broadcast %cst_7 : f32 to vector<16x128xf32>
    %12 = arith.addf %11, %10 : vector<16x128xf32>
    %13 = arith.mulf %7, %12 : vector<16x128xf32>
    %c0_8 = arith.constant 0 : index
    %c0_9 = arith.constant 0 : index
    %14 = vector.load %arg4[%c0_8, %c0_9] : memref<128x32xf32, #tpu.memory_space<vmem>>, vector<128x32xf32>
    %cst_10 = arith.constant dense<0.000000e+00> : vector<16x32xf32>
    %15 = tpu.matmul %13, %14, %cst_10 {dimension_numbers = #tpu.dot_dimension_numbers<[1], [0], [0], [1], [0, 0, 1, 1], [], []>} : vector<16x128xf32>, vector<128x32xf32>, vector<16x32xf32> -> vector<16x32xf32>
    %c0_11 = arith.constant 0 : index
    %c0_12 = arith.constant 0 : index
    %16 = vector.load %arg5[%c0_11, %c0_12] : memref<1x32xf32, #tpu.memory_space<vmem>>, vector<1x32xf32>
    %17 = vector.broadcast %16 : vector<1x32xf32> to vector<16x32xf32>
    %18 = arith.addf %15, %17 : vector<16x32xf32>
    %c0_13 = arith.constant 0 : index
    %c0_14 = arith.constant 0 : index
    %19 = vector.load %arg6[%c0_13, %c0_14] : memref<16x32xf32, #tpu.memory_space<vmem>>, vector<16x32xf32>
    tpu.vector_store %arg6[%c0_13, %c0_14], %18 {strides = array<i32>} : memref<16x32xf32, #tpu.memory_space<vmem>>, vector<16x32xf32>,
    return
  }
  func.func @transform_0(%arg0: i32) -> (i32, i32) {
    %c0_i32 = arith.constant 0 : i32
    %c0_i32_0 = arith.constant 0 : i32
    return %arg0, %c0_i32 : i32, i32
  }
  func.func @transform_1(%arg0: i32) -> (i32, i32) {
    %c0_i32 = arith.constant 0 : i32
    %c0_i32_0 = arith.constant 0 : i32
    %c0_i32_1 = arith.constant 0 : i32
    return %c0_i32, %c0_i32_0 : i32, i32
  }
  func.func @transform_2(%arg0: i32) -> (i32, i32) {
    %c0_i32 = arith.constant 0 : i32
    %c0_i32_0 = arith.constant 0 : i32
    %c0_i32_1 = arith.constant 0 : i32
    return %c0_i32, %c0_i32_0 : i32, i32
  }
  func.func @transform_3(%arg0: i32) -> (i32, i32) {
    %c0_i32 = arith.constant 0 : i32
    %c0_i32_0 = arith.constant 0 : i32
    %c0_i32_1 = arith.constant 0 : i32
    return %c0_i32, %c0_i32_0 : i32, i32
  }
  func.func @transform_4(%arg0: i32) -> (i32, i32) {
    %c0_i32 = arith.constant 0 : i32
    %c0_i32_0 = arith.constant 0 : i32
    %c0_i32_1 = arith.constant 0 : i32
    return %c0_i32, %c0_i32_0 : i32, i32
  }
  func.func @transform_5(%arg0: i32) -> (i32, i32) {
    %c0_i32 = arith.constant 0 : i32
    %c0_i32_0 = arith.constant 0 : i32
    return %arg0, %c0_i32 : i32, i32
  }
}

</mosaic_0001>

<llo_original>
// kernel: mlp_forward.1
$region0: #{mlp_forward.1}
  #allocation0 [shape = 'u32[]', space=smem, size = 0x4, offset = 0x4, fixed_abs, tag = 'smem constant byte address 0x4 - core index']
  #allocation1 [shape = 'u32[144,128]{1,0:T(1,128)}', space=vmem, size = 0x12000, scoped, tag = 'internal scratch']
  %s0 = inlined_call_operand.vmem [shape: f32[16,32], index: 0, kind: input, shape index: {}]
  %s1 = inlined_call_operand.vmem [shape: f32[32,128], index: 1, kind: input, shape index: {}]
  %s2 = inlined_call_operand.vmem [shape: f32[1,128], index: 2, kind: input, shape index: {}]
  %s3 = inlined_call_operand.vmem [shape: f32[128,32], index: 3, kind: input, shape index: {}]
  %s4 = inlined_call_operand.vmem [shape: f32[1,32], index: 4, kind: input, shape index: {}]
  %s5 = inlined_call_operand.hbm [shape: f32[16,32], index: 5, kind: output, shape index: {}]
  %s6 = sld [smem:[#allocation0]]
  $region30: #{mlp_forward.1} parent=0
    _
  %s8 = ssub.s32 1, %s6
  %s9 = scalar_select 0, %s8, %s6
  $region1: #{mlp_forward.1} parent=0
    #allocation2 [shape = 'u8[8192]{0}', space=vmem, size = 0x2000, scoped, tag = 'output window, operand 0, single buffered']
    #allocation3 [shape = 's32[1]{0}', space=sflag, size = 0x4, scoped, tag = 'scoped memory for mlp_forward.1']
    %10 = vsyncpa [#allocation3], 0
    // Predicated region
    $region2: #{mlp_forward.1} parent=1 // pred_check
      _
    $region3: #{mlp_forward.1} parent=1 // pred_check_branch
      %12 = sbr.rel (0) target = $region5
    $region4: #{mlp_forward.1} parent=1 // pred_region
      _
    $region5: #{mlp_forward.1} parent=1 // pred_fallthru
      _
    // Predicated region
    $region6: #{mlp_forward.1} parent=1 // pred_check
      _
    $region7: #{mlp_forward.1} parent=1 // pred_check_branch
      %14 = sbr.rel (0) target = $region9
    $region8: #{mlp_forward.1} parent=1 // pred_region
      _
    $region9: #{mlp_forward.1} parent=1 // pred_fallthru
      _
    // Predicated region
    $region10: #{mlp_forward.1} parent=1 // pred_check
      _
    $region11: #{mlp_forward.1} parent=1 // pred_check_branch
      %16 = sbr.rel (0) target = $region13
    $region12: #{mlp_forward.1} parent=1 // pred_region
      _
    $region13: #{mlp_forward.1} parent=1 // pred_fallthru
      _
    // Predicated region
    $region14: #{mlp_forward.1} parent=1 // pred_check
      _
    $region15: #{mlp_forward.1} parent=1 // pred_check_branch
      %18 = sbr.rel (0) target = $region17
    $region16: #{mlp_forward.1} parent=1 // pred_region
      _
    $region17: #{mlp_forward.1} parent=1 // pred_fallthru
      _
    // Predicated region
    $region18: #{mlp_forward.1} parent=1 // pred_check
      _
    $region19: #{mlp_forward.1} parent=1 // pred_check_branch
      %20 = sbr.rel (0) target = $region21
    $region20: #{mlp_forward.1} parent=1 // pred_region
      _
    $region21: #{mlp_forward.1} parent=1 // pred_fallthru
      _
    %v21 = vld [vmem:[%s0] sm:$0xff]
    %v22 = vld [vmem:[%s0 + $0x8] sm:$0xff]
    %v23 = vld [vmem:[%s1] sm:$0xff]
    %v24 = vld [vmem:[%s1 + $0x8] sm:$0xff]
    %v25 = vld [vmem:[%s1 + $0x10] sm:$0xff]
    %v26 = vld [vmem:[%s1 + $0x18] sm:$0xff]
    %v27 = vld [vmem:[%s2] sm:$0x1]
    %v29 = vlaneseq
    %v30 = vshrl.u32 %v29, 7
    %v31 = vsub.s32 0, %v30
    %v32 = vrot.slane %v27, %v31
    %vm34 = vcmask 261120
    %v36 = vsel %vm34, %v21, 0
    %v39 = vsel %vm34, %v22, 0
    %41 = vmatprep.subr.mxu0 0.0
    %42 = vmatpush1.msra.mxu0 %v23
    %43 = vmatprep.subr.mxu0 0.0
    %44 = vmatpush1.msra.mxu0 %v24
    %45 = vmatprep.subr.mxu0 0.0
    %46 = vmatpush1.msra.mxu0 %v25
    %47 = vmatprep.subr.mxu0 0.0
    %48 = vmatpush1.msra.mxu0 %v26
    %49 = vmatprep.subr.mxu0 0.0
    %50 = vmatpush1.msra.mxu0 0.0
    %51 = vmatprep.subr.mxu0 0.0
    %52 = vmatpush1.msra.mxu0 0.0
    %53 = vmatprep.subr.mxu0 0.0
    %54 = vmatpush1.msra.mxu0 0.0
    %55 = vmatprep.subr.mxu0 0.0
    %56 = vmatpush1.msra.mxu0 0.0
    %57 = vmatprep.subr.mxu0 0.0
    %58 = vmatpush1.msra.mxu0 0.0
    %59 = vmatprep.subr.mxu0 0.0
    %60 = vmatpush1.msra.mxu0 0.0
    %61 = vmatprep.subr.mxu0 0.0
    %62 = vmatpush1.msra.mxu0 0.0
    %63 = vmatprep.subr.mxu0 0.0
    %64 = vmatpush1.msra.mxu0 0.0
    %65 = vmatprep.subr.mxu0 0.0
    %66 = vmatpush1.msra.mxu0 0.0
    %67 = vmatprep.subr.mxu0 0.0
    %68 = vmatpush1.msra.mxu0 0.0
    %69 = vmatprep.subr.mxu0 0.0
    %70 = vmatpush1.msra.mxu0 0.0
    %71 = vmatprep.subr.mxu0 0.0
    %72 = vmatpush1.msra.mxu0 0.0
    %73 = vmatprep.subr.mxu0 0.0
    %74 = vmatpush1.msra.mxu0 0.0
    %75 = vmatprep.subr.mxu0 0.0
    %76 = vmatpush1.msra.mxu0 0.0
    %77 = vmatprep.subr.mxu0 0.0
    %78 = vmatpush1.msra.mxu0 0.0
    %79 = vmatprep.subr.mxu0 0.0
    %80 = vmatpush1.msra.mxu0 0.0
    %81 = vmatprep.subr.mxu0 0.0
    %82 = vmatpush1.msra.mxu0 0.0
    %83 = vmatprep.subr.mxu0 0.0
    %84 = vmatpush1.msra.mxu0 0.0
    %85 = vmatprep.subr.mxu0 0.0
    %86 = vmatpush1.msra.mxu0 0.0
    %87 = vmatprep.subr.mxu0 0.0
    %88 = vmatpush1.msra.mxu0 0.0
    %89 = vmatprep.subr.mxu0 0.0
    %90 = vmatpush1.msra.mxu0 0.0
    %91 = vmatprep.subr.mxu0 0.0
    %92 = vmatpush1.msra.mxu0 0.0
    %93 = vmatprep.subr.mxu0 0.0
    %94 = vmatpush1.msra.mxu0 0.0
    %95 = vmatprep.subr.mxu0 0.0
    %96 = vmatpush1.msra.mxu0 0.0
    %97 = vmatprep.subr.mxu0 0.0
    %98 = vmatpush1.msra.mxu0 0.0
    %99 = vmatprep.subr.mxu0 0.0
    %100 = vmatpush1.msra.mxu0 0.0
    %101 = vmatprep.subr.mxu0 0.0
    %102 = vmatpush1.msra.mxu0 0.0
    %103 = vmatprep.subr.mxu0 0.0
    %104 = vmatpush1.msra.mxu0 0.0
    %105 = vmatprep.mubr.f32.mxu0 0.0
    %106 = vmatmul.mubr.f32.gmra.mrb[0].mxu0 %v36
    %v107 = vpop.f32.mrb[0].mxu0
    %v108 = vadd.f32 %v32, %v107
    %v109 = vpop.f32.mrb[0].mxu0
    %110 = vmatprep.mubr.f32.mxu0 0.0
    %111 = vmatmul.mubr.f32.gmra.mrb[0].mxu0 %v39
    %v112 = vpop.f32.mrb[0].mxu0
    %v113 = vadd.f32 %v32, %v112
    %v114 = vpop.f32.mrb[0].mxu0
    %115 = vdwg.mxu0
    %v116 = vmul.f32 %v108, 0.5
    %v117 = vmul.f32 %v113, 0.5
    %v118 = vmul.f32 %v108, 0.70710677
    %v119 = vmul.f32 %v113, 0.70710677
    %v120 = verf.f32.pop %v118
    %v121 = verf.f32.pop %v119
    %v122 = vadd.f32 %v120, 1.0
    %v123 = vadd.f32 %v121, 1.0
    %v124 = vmul.f32 %v116, %v122
    %v125 = vmul.f32 %v117, %v123
    %v126 = vld [vmem:[%s3] sm:$0xff]
    %v127 = vld [vmem:[%s3 + $0x8] sm:$0xff]
    %v128 = vld [vmem:[%s3 + $0x10] sm:$0xff]
    %v129 = vld [vmem:[%s3 + $0x18] sm:$0xff]
    %v130 = vld [vmem:[%s3 + $0x20] sm:$0xff]
    %v131 = vld [vmem:[%s3 + $0x28] sm:$0xff]
    %v132 = vld [vmem:[%s3 + $0x30] sm:$0xff]
    %v133 = vld [vmem:[%s3 + $0x38] sm:$0xff]
    %v134 = vld [vmem:[%s3 + $0x40] sm:$0xff]
    %v135 = vld [vmem:[%s3 + $0x48] sm:$0xff]
    %v136 = vld [vmem:[%s3 + $0x50] sm:$0xff]
    %v137 = vld [vmem:[%s3 + $0x58] sm:$0xff]
    %v138 = vld [vmem:[%s3 + $0x60] sm:$0xff]
    %v139 = vld [vmem:[%s3 + $0x68] sm:$0xff]
    %v140 = vld [vmem:[%s3 + $0x70] sm:$0xff]
    %v141 = vld [vmem:[%s3 + $0x78] sm:$0xff]
    %v142 = vld [vmem:[%s4] sm:$0x1]
    %v144 = vlaneseq
    %v145 = vshrl.u32 %v144, 7
    %v146 = vsub.s32 0, %v145
    %v147 = vrot.slane %v142, %v146
    %149 = vmatprep.subr.mxu0 0.0
    %150 = vmatpush1.msra.mxu0 %v126
    %151 = vmatprep.subr.mxu0 0.0
    %152 = vmatpush1.msra.mxu0 %v127
    %153 = vmatprep.subr.mxu0 0.0
    %154 = vmatpush1.msra.mxu0 %v128
    %155 = vmatprep.subr.mxu0 0.0
    %156 = vmatpush1.msra.mxu0 %v129
    %157 = vmatprep.subr.mxu0 0.0
    %158 = vmatpush1.msra.mxu0 %v130
    %159 = vmatprep.subr.mxu0 0.0
    %160 = vmatpush1.msra.mxu0 %v131
    %161 = vmatprep.subr.mxu0 0.0
    %162 = vmatpush1.msra.mxu0 %v132
    %163 = vmatprep.subr.mxu0 0.0
    %164 = vmatpush1.msra.mxu0 %v133
    %165 = vmatprep.subr.mxu0 0.0
    %166 = vmatpush1.msra.mxu0 %v134
    %167 = vmatprep.subr.mxu0 0.0
    %168 = vmatpush1.msra.mxu0 %v135
    %169 = vmatprep.subr.mxu0 0.0
    %170 = vmatpush1.msra.mxu0 %v136
    %171 = vmatprep.subr.mxu0 0.0
    %172 = vmatpush1.msra.mxu0 %v137
    %173 = vmatprep.subr.mxu0 0.0
    %174 = vmatpush1.msra.mxu0 %v138
    %175 = vmatprep.subr.mxu0 0.0
    %176 = vmatpush1.msra.mxu0 %v139
    %177 = vmatprep.subr.mxu0 0.0
    %178 = vmatpush1.msra.mxu0 %v140
    %179 = vmatprep.subr.mxu0 0.0
    %180 = vmatpush1.msra.mxu0 %v141
    %181 = vmatprep.subr.mxu0 0.0
    %182 = vmatpush1.msra.mxu0 0.0
    %183 = vmatprep.subr.mxu0 0.0
    %184 = vmatpush1.msra.mxu0 0.0
    %185 = vmatprep.subr.mxu0 0.0
    %186 = vmatpush1.msra.mxu0 0.0
    %187 = vmatprep.subr.mxu0 0.0
    %188 = vmatpush1.msra.mxu0 0.0
    %189 = vmatprep.subr.mxu0 0.0
    %190 = vmatpush1.msra.mxu0 0.0
    %191 = vmatprep.subr.mxu0 0.0
    %192 = vmatpush1.msra.mxu0 0.0
    %193 = vmatprep.subr.mxu0 0.0
    %194 = vmatpush1.msra.mxu0 0.0
    %195 = vmatprep.subr.mxu0 0.0
    %196 = vmatpush1.msra.mxu0 0.0
    %197 = vmatprep.subr.mxu0 0.0
    %198 = vmatpush1.msra.mxu0 0.0
    %199 = vmatprep.subr.mxu0 0.0
    %200 = vmatpush1.msra.mxu0 0.0
    %201 = vmatprep.subr.mxu0 0.0
    %202 = vmatpush1.msra.mxu0 0.0
    %203 = vmatprep.subr.mxu0 0.0
    %204 = vmatpush1.msra.mxu0 0.0
    %205 = vmatprep.subr.mxu0 0.0
    %206 = vmatpush1.msra.mxu0 0.0
    %207 = vmatprep.subr.mxu0 0.0
    %208 = vmatpush1.msra.mxu0 0.0
    %209 = vmatprep.subr.mxu0 0.0
    %210 = vmatpush1.msra.mxu0 0.0
    %211 = vmatprep.subr.mxu0 0.0
    %212 = vmatpush1.msra.mxu0 0.0
    %213 = vmatprep.mubr.f32.mxu0 0.0
    %214 = vmatmul.mubr.f32.gmra.mrb[0].mxu0 %v124
    %v215 = vpop.f32.mrb[0].mxu0
    %v216 = vadd.f32 %v147, %v215
    %v217 = vpop.f32.mrb[0].mxu0
    %218 = vmatprep.mubr.f32.mxu0 0.0
    %219 = vmatmul.mubr.f32.gmra.mrb[0].mxu0 %v125
    %v220 = vpop.f32.mrb[0].mxu0
    %v221 = vadd.f32 %v147, %v220
    %v222 = vpop.f32.mrb[0].mxu0
    %223 = vdwg.mxu0
    %224 = vst.msk [vmem:[#allocation2] sm:$0xff] %vm34, %v216
    %225 = vst.msk [vmem:[#allocation2 + $0x8] sm:$0xff] %vm34, %v221
    // Predicated region
    $region22: #{mlp_forward.1} parent=1 // pred_check
      _
    $region23: #{mlp_forward.1} parent=1 // pred_check_branch
      %227 = sbr.rel (0) target = $region25
    $region24: #{mlp_forward.1} parent=1 // pred_region
      %s229 = ssub.s32 256, 256
      %230 = vsyncadd [#allocation3], %s229
      %s231 = sshll.u32 [#allocation2], 4
      %s232 = int_to_ptr.vmem [resolvable:$true] %s231
      %237 = dma.vmem_to_hbm [thread:$0]  %s232, 256, %s5, [#allocation3], 128, 128, 8
    $region25: #{mlp_forward.1} parent=1 // pred_fallthru
      _
    // Predicated region
    $region26: #{mlp_forward.1} parent=1 // pred_check
      _
    $region27: #{mlp_forward.1} parent=1 // pred_check_branch
      %239 = sbr.rel (0) target = $region29
    $region28: #{mlp_forward.1} parent=1 // pred_region
      %240 = dma.done [#allocation3], 256
    $region29: #{mlp_forward.1} parent=1 // pred_fallthru
      _
    %241 = vsyncpa [#allocation3], 1

</llo_original>
